<compile_context>
chip_gen: v6e
topology: v6e:2x2x1
jax: 0.10.0
libtpu: 0.0.40
codegen_flags: <defaults>
</compile_context>

<pallas_src>
import functools
import math

import jax
import jax.numpy as jnp
from jax.experimental import pallas as pl
from jax.experimental.pallas import tpu as pltpu


# --------------------------------------------------------------------------
# Kernels
# --------------------------------------------------------------------------

def _mean_mid_kernel(inv_n, x_ref, o_ref):
    """Reduce a middle (sublane) axis.  x_ref: (1, R, Tp)  ->  o_ref: (1, 1, Tp)."""
    s = jnp.sum(x_ref[...].astype(jnp.float32), axis=1, keepdims=True)
    o_ref[...] = (s * jnp.float32(inv_n)).astype(o_ref.dtype)


def _mean_last_kernel(inv_n, x_ref, o_ref):
    """Reduce the trailing (lane) axis.  x_ref: (Tm, R)  ->  o_ref: (Tm, 1)."""
    s = jnp.sum(x_ref[...].astype(jnp.float32), axis=-1, keepdims=True)
    o_ref[...] = (s * jnp.float32(inv_n)).astype(o_ref.dtype)


# --------------------------------------------------------------------------
# Tiling helpers
# --------------------------------------------------------------------------

def _largest_dividing_tile(n, unit, max_tile):
    """Largest multiple of `unit` that divides n and is <= max_tile, else n (full)."""
    t = (min(max_tile, n) // unit) * unit
    while t >= unit:
        if n % t == 0:
            return t
        t -= unit
    return n


_VMEM_BLOCK_BUDGET = 4 << 20  # bytes per input block (double-buffered by Pallas)


def _mean_over_middle(x3, inv_n):
    """x3: (pre, red, post) -> (pre, post); reduce axis 1 (sublane reduction)."""
    pre, red, post = x3.shape
    itemsize = jnp.dtype(x3.dtype).itemsize
    max_tp = max(128, min(4096,
                          (_VMEM_BLOCK_BUDGET // max(1, red * itemsize)) // 128 * 128))
    tp = _largest_dividing_tile(post, 128, max_tp)
    # TODO(synk): tile `red` with a VMEM accumulator if (red * tp) ever exceeds VMEM.
    grid = (pre, post // tp)
    out = pl.pallas_call(
        functools.partial(_mean_mid_kernel, inv_n),
        out_shape=jax.ShapeDtypeStruct((pre, 1, post), x3.dtype),
        grid_spec=pltpu.PrefetchScalarGridSpec(
            num_scalar_prefetch=0,
            grid=grid,
            in_specs=[pl.BlockSpec((1, red, tp), lambda i, j: (i, 0, j))],
            out_specs=pl.BlockSpec((1, 1, tp), lambda i, j: (i, 0, j)),
        ),
        compiler_params=pltpu.CompilerParams(
            dimension_semantics=("parallel", "parallel")),
    )(x3)
    return out.reshape(pre, post)


def _mean_over_last(x2, inv_n):
    """x2: (pre, red) -> (pre,); reduce the trailing axis (lane reduction)."""
    pre, red = x2.shape
    itemsize = jnp.dtype(x2.dtype).itemsize
    max_tm = max(8, min(4096,
                        (_VMEM_BLOCK_BUDGET // max(1, red * itemsize)) // 8 * 8))
    tm = _largest_dividing_tile(pre, 8, max_tm)
    grid = (pre // tm,)
    out = pl.pallas_call(
        functools.partial(_mean_last_kernel, inv_n),
        out_shape=jax.ShapeDtypeStruct((pre, 1), x2.dtype),
        grid_spec=pltpu.PrefetchScalarGridSpec(
            num_scalar_prefetch=0,
            grid=grid,
            in_specs=[pl.BlockSpec((tm, red), lambda i: (i, 0))],
            out_specs=pl.BlockSpec((tm, 1), lambda i: (i, 0)),
        ),
        compiler_params=pltpu.CompilerParams(
            dimension_semantics=("parallel",)),
    )(x2)
    return out.reshape(pre)


# --------------------------------------------------------------------------
# Public wrapper: torch.mean(x, dim, keepdim) semantics
# --------------------------------------------------------------------------

@functools.partial(jax.jit, static_argnames=("dim", "keepdim"))
def mean_pallas(x, dim, keepdim=False):
    ndim = x.ndim
    if isinstance(dim, int):
        dims = (dim % ndim,)
    else:
        dims = tuple(sorted(d % ndim for d in dim))
    assert len(set(dims)) == len(dims) and len(dims) >= 1, "invalid dim"

    shape = x.shape
    n_red = 1
    for d in dims:
        n_red *= shape[d]
    inv_n = 1.0 / float(n_red)

    contiguous = dims == tuple(range(dims[0], dims[-1] + 1))
    kept = [i for i in range(ndim) if i not in dims]
    kept_shape = tuple(shape[i] for i in kept)

    if contiguous and dims[-1] == ndim - 1:
        # Trailing reduction: reshape (free) to (pre, red), reduce over lanes.
        pre = int(math.prod(shape[:dims[0]])) if dims[0] > 0 else 1
        res = _mean_over_last(x.reshape(pre, n_red), inv_n)          # (pre,)
    elif contiguous:
        # Middle-axis reduction (e.g. dim=1 of NCHW): reshape (free) to
        # (pre, red, post); pixels stay on lanes, output store is lane-dense.
        pre = int(math.prod(shape[:dims[0]])) if dims[0] > 0 else 1
        post = int(math.prod(shape[dims[-1] + 1:]))
        res = _mean_over_middle(x.reshape(pre, n_red, post), inv_n)  # (pre, post)
    else:
        # Non-contiguous reduced axes: one wrapper transpose, then trailing case.
        xt = jnp.transpose(x, tuple(kept) + dims)
        pre = int(math.prod(kept_shape)) if kept_shape else 1
        res = _mean_over_last(xt.reshape(pre, n_red), inv_n)         # (pre,)

    if keepdim:
        out_shape = tuple(1 if i in dims else shape[i] for i in range(ndim))
    else:
        out_shape = kept_shape
    return res.reshape(out_shape)


# --------------------------------------------------------------------------
# Self-test
# --------------------------------------------------------------------------

if __name__ == "__main__":
    key = jax.random.PRNGKey(0)
    x = jax.random.normal(key, (2, 4, 16, 16), dtype=jnp.float32)

    # Primary case: mean over the channel axis (dim=1), keepdim=False.
    out = mean_pallas(x, dim=1, keepdim=False)
    out = jax.block_until_ready(out)
    ref = jnp.mean(x, axis=1)
    assert out.shape == ref.shape, (out.shape, ref.shape)
    assert jnp.allclose(out, ref, atol=1e-5, rtol=1e-5), "mismatch vs reference (dim=1)"

    # Extra coverage: trailing dims + keepdim, last dim, non-contiguous dims, leading dim.
    for dim, keepdim in [((2, 3), True), (-1, False), ((1, 3), False), (0, False)]:
        o = jax.block_until_ready(mean_pallas(x, dim=dim, keepdim=keepdim))
        r = jnp.mean(x, axis=dim, keepdims=keepdim)
        assert o.shape == r.shape, (dim, keepdim, o.shape, r.shape)
        assert jnp.allclose(o, r, atol=1e-5, rtol=1e-5), ("mismatch", dim, keepdim)

    print("KERNEL_OK")
</pallas_src>

<mosaic_0001>
module attributes {stable_mosaic.version = 11 : i64} {
  func.func @_mean_mid_kernel(%arg0: i32, %arg1: i32, %arg2: memref<1x4x256xf32, #tpu.memory_space<vmem>>, %arg3: memref<1x1x256xf32, #tpu.memory_space<vmem>>) attributes {dimension_semantics = [#tpu.dimension_semantics<parallel>, #tpu.dimension_semantics<parallel>], iteration_bounds = array<i64: 2, 1>, scalar_prefetch = 0 : i64, scratch_operands = 0 : i64, tpu.core_type = #tpu.core_type<tc>, window_params = [{transform_indices = @transform_0, window_bounds = array<i64: 1, 4, 256>}, {transform_indices = @transform_1, window_bounds = array<i64: 1, 1, 256>}]} {
    %c0 = arith.constant 0 : index
    %c0_0 = arith.constant 0 : index
    %c0_1 = arith.constant 0 : index
    %0 = vector.load %arg2[%c0, %c0_0, %c0_1] : memref<1x4x256xf32, #tpu.memory_space<vmem>>, vector<1x4x256xf32>
    %cst = arith.constant dense<0.000000e+00> : vector<1x256xf32>
    %1 = vector.multi_reduction <add>, %0, %cst [1] : vector<1x4x256xf32> to vector<1x256xf32>
    %2 = vector.shape_cast %1 : vector<1x256xf32> to vector<1x1x256xf32>
    %cst_2 = arith.constant 2.500000e-01 : f32
    %3 = vector.broadcast %cst_2 : f32 to vector<1x1x256xf32>
    %4 = arith.mulf %2, %3 : vector<1x1x256xf32>
    %c0_3 = arith.constant 0 : index
    %c0_4 = arith.constant 0 : index
    %c0_5 = arith.constant 0 : index
    %5 = vector.load %arg3[%c0_3, %c0_4, %c0_5] : memref<1x1x256xf32, #tpu.memory_space<vmem>>, vector<1x1x256xf32>
    tpu.vector_store %arg3[%c0_3, %c0_4, %c0_5], %4 {strides = array<i32>} : memref<1x1x256xf32, #tpu.memory_space<vmem>>, vector<1x1x256xf32>,
    return
  }
  func.func @transform_0(%arg0: i32, %arg1: i32) -> (i32, i32, i32) {
    %c0_i32 = arith.constant 0 : i32
    %c0_i32_0 = arith.constant 0 : i32
    return %arg0, %c0_i32, %arg1 : i32, i32, i32
  }
  func.func @transform_1(%arg0: i32, %arg1: i32) -> (i32, i32, i32) {
    %c0_i32 = arith.constant 0 : i32
    %c0_i32_0 = arith.constant 0 : i32
    return %arg0, %c0_i32, %arg1 : i32, i32, i32
  }
}

</mosaic_0001>

<llo_original>
// kernel: mean_pallas.1
$region0: #{mean_pallas.1}
  #allocation0 [shape = 'u32[]', space=smem, size = 0x4, offset = 0x4, fixed_abs, tag = 'smem constant byte address 0x4 - core index']
  #allocation1 [shape = 'u32[144,128]{1,0:T(1,128)}', space=vmem, size = 0x12000, scoped, tag = 'internal scratch']
  %s0 = inlined_call_operand.vmem [shape: f32[2,4,256], index: 0, kind: input, shape index: {}]
  %s1 = inlined_call_operand.vmem [shape: f32[2,1,256], index: 1, kind: output, shape index: {}]
  %s2 = sld [smem:[#allocation0]]
  $region37: #{mean_pallas.1} parent=0
    _
  %s4 = ssub.s32 1, %s2
  %s5 = scalar_select 0, %s4, %s2
  loop: start=0, step=1, limit=4
  $region2: #{mean_pallas.1} parent=0 // loop_pre_header
    _
  $region3: #{mean_pallas.1} parent=0 // loop_header
    %s7 = sphi 0, %s11
    %p8 = scmp.ge.s32.totalorder %s7, 4
    %s14 = sphi 0, %s26
    %s15 = sphi 0, %s22
    %s16 = sphi 0, %s14
    %s17 = sphi 0, %s15
    %s18 = sphi 0, %s16
    %s19 = sphi 0, %s17
    %s31 = sphi 0, %s33
    %s34 = sphi 0, %s31
    %s35 = sphi 0, %s34
    %s51 = sphi 0, %s35
    %s59 = sphi 0, %s61
    %s62 = sphi 0, %s59
    %s63 = sphi 0, %s62
    %s79 = sphi 0, %s63
  $region4: #{mean_pallas.1} parent=0 // loop_header_branch
    %10 = sbr.rel (%p8) target = $region8
  $region5: #{mean_pallas.1} parent=0 // loop_body
    %s12 = ssub.s32 %s7, 1
    %s13 = ssub.s32 %s7, 2
    %s20 = sadd.s32 1, %s15
    %p21 = scmp.ge.s32.totalorder %s20, 1
    %s22 = scalar_select %p21, 0, %s20
    %s23 = sadd.s32 1, %s14
    %s24 = scalar_select %p21, %s23, %s14
    %p25 = scmp.ge.s32.totalorder %s24, 2
    %s26 = scalar_select %p25, 0, %s24
    %s27 = ssub.s32 %s14, %s26
    %s28 = ssub.s32 %s15, %s22
    %s29 = sor.u32 %s27, %s28
    %p30 = scmp.eq.s32.totalorder %s29, 0
    %s32 = sadd.s32 %s31, 1
    %s33 = scalar_select %p30, %s31, %s32
    %p36 = pneg %p30
    %p37 = scmp.eq.s32.totalorder %s7, 1
    %p38 = por %p36, %p37
    %p39 = scmp.ne.s32.totalorder %s31, %s34
    %p40 = scmp.eq.s32.totalorder %s7, 0
    %p41 = por %p39, %p40
    %p42 = scmp.ne.s32.totalorder %s31, %s34
    %p43 = scmp.eq.s32.totalorder %s12, 1
    %p44 = por %p42, %p43
    %p45 = scmp.ne.s32.totalorder %s34, %s35
    %p46 = scmp.eq.s32.totalorder %s12, 0
    %p47 = por %p45, %p46
    %p48 = scmp.ne.s32.totalorder %s34, %s35
    %p49 = scmp.eq.s32.totalorder %s13, 1
    %p50 = por %p48, %p49
    %p52 = scmp.ne.s32.totalorder %s35, %s51
    %p53 = scmp.eq.s32.totalorder %s13, 0
    %p54 = por %p52, %p53
    %s55 = ssub.s32 %s14, %s26
    %s56 = ssub.s32 %s15, %s22
    %s57 = sor.u32 %s55, %s56
    %p58 = scmp.eq.s32.totalorder %s57, 0
    %s60 = sadd.s32 %s59, 1
    %s61 = scalar_select %p58, %s59, %s60
    %p64 = pneg %p58
    %p65 = scmp.eq.s32.totalorder %s7, 1
    %p66 = por %p64, %p65
    %p67 = scmp.ne.s32.totalorder %s59, %s62
    %p68 = scmp.eq.s32.totalorder %s7, 0
    %p69 = por %p67, %p68
    %p70 = scmp.ne.s32.totalorder %s59, %s62
    %p71 = scmp.eq.s32.totalorder %s12, 1
    %p72 = por %p70, %p71
    %p73 = scmp.ne.s32.totalorder %s62, %s63
    %p74 = scmp.eq.s32.totalorder %s12, 0
    %p75 = por %p73, %p74
    %p76 = scmp.ne.s32.totalorder %s62, %s63
    %p77 = scmp.eq.s32.totalorder %s13, 1
    %p78 = por %p76, %p77
    %p80 = scmp.ne.s32.totalorder %s63, %s79
    %p81 = scmp.eq.s32.totalorder %s13, 0
    %p82 = por %p80, %p81
    %p83 = scmp.le.s32.totalorder 1, %s7
    %p84 = scmp.lt.s32.totalorder %s7, 3
    %p85 = pnand %p83, %p84
    %p86 = pneg %p85
    // Predicated region
    $region9: #{mean_pallas.1} parent=5 // pred_check
      _
    $region10: #{mean_pallas.1} parent=5 // pred_check_branch
      %88 = sbr.rel (%p85) target = $region12
    $region11: #{mean_pallas.1} parent=5 // pred_region
      %s89 = ssub.s32 %s7, 1
    $region12: #{mean_pallas.1} parent=5 // pred_fallthru
      _
    %p90 = scmp.lt.s32.totalorder %s7, 2
    // Predicated region
    $region13: #{mean_pallas.1} parent=5 // pred_check
      %p91 = pneg %p90
    $region14: #{mean_pallas.1} parent=5 // pred_check_branch
      %93 = sbr.rel (%p91) target = $region16
    $region15: #{mean_pallas.1} parent=5 // pred_region
      // Predicated region
      $region17: #{mean_pallas.1} parent=15 // pred_check
        %p94 = pneg %p41
      $region18: #{mean_pallas.1} parent=15 // pred_check_branch
        %96 = sbr.rel (%p94) target = $region20
      $region19: #{mean_pallas.1} parent=15 // pred_region
        %s97 = smul.u32 2, %s15
        %p98 = scmp.lt.s32.totalorder %s14, 1
        %s99 = scalar_select %p98, %s14, 1
        %p100 = scmp.lt.s32.totalorder %s97, 1
        %s101 = scalar_select %p100, %s97, 1
        %s102 = smul.addr %s99, 2
        %s103 = sadd.s32 %s101, %s102
        %s104 = smul.addr %s103, 4
        %s105 = scalar_lea.vmem %s0, %s104
        %s106 = smul.u32 2, %s15
      $region20: #{mean_pallas.1} parent=15 // pred_fallthru
        _
    $region16: #{mean_pallas.1} parent=5 // pred_fallthru
      _
    %p107 = scmp.le.s32.totalorder 1, %s7
    %p108 = scmp.lt.s32.totalorder %s7, 3
    %p109 = pnand %p107, %p108
    %p110 = pneg %p109
    // Predicated region
    $region21: #{mean_pallas.1} parent=5 // pred_check
      _
    $region22: #{mean_pallas.1} parent=5 // pred_check_branch
      %112 = sbr.rel (%p109) target = $region24
    $region23: #{mean_pallas.1} parent=5 // pred_region
      %s113 = ssub.s32 %s7, 1
      %s114 = smul.u32 2, %s17
      %p115 = scmp.lt.s32.totalorder %s16, 1
      %s116 = scalar_select %p115, %s16, 1
      %p117 = scmp.lt.s32.totalorder %s114, 1
      %s118 = scalar_select %p117, %s114, 1
      %s119 = smul.addr %s116, 2
      %s120 = sadd.s32 %s118, %s119
      %s121 = smul.addr %s120, 4
      %s122 = scalar_lea.vmem %s0, %s121
      %p123 = pneg %p47
      %p124 = pneg %p44
      %p125 = pneg %p75
      %p126 = pneg %p72
      %s127 = smul.u32 2, %s17
      %p128 = scmp.lt.s32.totalorder %s16, 1
      %s129 = scalar_select %p128, %s16, 1
      %p130 = scmp.lt.s32.totalorder %s127, 1
      %s131 = scalar_select %p130, %s127, 1
      %s132 = smul.addr %s129, 2
      %s133 = sadd.s32 %s131, %s132
      %s134 = scalar_lea.vmem %s1, %s133
      %s135 = smul.u32 2, %s17
      %p136 = scmp.lt.s32.totalorder %s16, 1
      %s137 = scalar_select %p136, %s16, 1
      %p138 = scmp.lt.s32.totalorder %s135, 1
      %s139 = scalar_select %p138, %s135, 1
      %s140 = smul.addr %s137, 2
      %s141 = sadd.s32 %s139, %s140
      %s142 = smul.addr %s141, 4
      %s143 = scalar_lea.vmem %s0, %s142
      %s144 = smul.u32 2, %s17
      %s145 = smul.u32 2, %s17
      %p146 = scmp.lt.s32.totalorder %s16, 1
      %s147 = scalar_select %p146, %s16, 1
      %p148 = scmp.lt.s32.totalorder %s145, 1
      %s149 = scalar_select %p148, %s145, 1
      %s150 = smul.addr %s147, 2
      %s151 = sadd.s32 %s149, %s150
      %s152 = scalar_lea.vmem %s1, %s151
      %s153 = smul.u32 2, %s17
      %v154 = vld [vmem:[%s143] sm:$0xff]
      %v156 = vcombine.high %v154, %v154
      %vm158 = vcmask 1043456
      %v159 = vsel %vm158, %v154, 0.0
      %v160 = vrot.slane %v159, 4
      %v161 = vadd.f32 %v159, %v160
      %v162 = vrot.slane %v161, 2
      %v163 = vadd.f32 %v161, %v162
      %v164 = vrot.slane %v163, 1
      %v165 = vadd.f32 %v163, %v164
      %v166 = vsel %vm158, %v156, 0.0
      %v167 = vrot.slane %v166, 4
      %v168 = vadd.f32 %v166, %v167
      %v169 = vrot.slane %v168, 2
      %v170 = vadd.f32 %v168, %v169
      %v171 = vrot.slane %v170, 1
      %v172 = vadd.f32 %v170, %v171
      %v173 = vmul.f32 %v165, 0.25
      %v174 = vmul.f32 %v172, 0.25
      %v177 = vcombine.low %v173, %v174
      %v179 = vunpack.c.l.s4 1966171168
      %v180 = vunpack.c.0.s8 %v179
      %v181 = vlaneseq
      %v182 = vshrl.u32 %v181, 7
      %v183 = vsub.s32 %v180, %v182
      %v184 = vrot.slane %v177, %v183
      %v186 = vunpack.c.l.s4 1966171168
      %v187 = vunpack.c.0.s8 %v186
      %v188 = vlaneseq
      %v189 = vshrl.u32 %v188, 7
      %v190 = vsub.s32 %v187, %v189
      %v191 = vrot.slane %v184, %v190
      %v193 = vlaneseq
      %vm194 = vcmp.ge.s32.totalorder %v193, 0
      %vm195 = vcmp.lt.s32.totalorder %v193, 256
      %vm196 = vmand %vm194, %vm195
      %197 = vst.msk [vmem:[%s152] sm:$0x3] %vm196, %v191
      %s198 = smul.u32 2, %s17
      %p199 = scmp.lt.s32.totalorder %s16, 1
      %s200 = scalar_select %p199, %s16, 1
      %p201 = scmp.lt.s32.totalorder %s198, 1
      %s202 = scalar_select %p201, %s198, 1
      %s203 = smul.addr %s200, 2
      %s204 = sadd.s32 %s202, %s203
      %s205 = scalar_lea.vmem %s1, %s204
      // Predicated region
      $region25: #{mean_pallas.1} parent=23 // pred_check
        %p206 = pneg %p72
      $region26: #{mean_pallas.1} parent=23 // pred_check_branch
        %208 = sbr.rel (%p206) target = $region28
      $region27: #{mean_pallas.1} parent=23 // pred_region
        %s209 = smul.u32 2, %s17
      $region28: #{mean_pallas.1} parent=23 // pred_fallthru
        _
    $region24: #{mean_pallas.1} parent=5 // pred_fallthru
      _
    %p210 = scmp.le.s32.totalorder 2, %s7
    // Predicated region
    $region29: #{mean_pallas.1} parent=5 // pred_check
      %p211 = pneg %p210
    $region30: #{mean_pallas.1} parent=5 // pred_check_branch
      %213 = sbr.rel (%p211) target = $region32
    $region31: #{mean_pallas.1} parent=5 // pred_region
      %s214 = ssub.s32 %s7, 2
      // Predicated region
      $region33: #{mean_pallas.1} parent=31 // pred_check
        %p215 = pneg %p78
      $region34: #{mean_pallas.1} parent=31 // pred_check_branch
        %217 = sbr.rel (%p215) target = $region36
      $region35: #{mean_pallas.1} parent=31 // pred_region
        %s218 = smul.u32 2, %s19
        %p219 = scmp.lt.s32.totalorder %s18, 1
        %s220 = scalar_select %p219, %s18, 1
        %p221 = scmp.lt.s32.totalorder %s218, 1
        %s222 = scalar_select %p221, %s218, 1
        %s223 = smul.addr %s220, 2
        %s224 = sadd.s32 %s222, %s223
        %s225 = scalar_lea.vmem %s1, %s224
      $region36: #{mean_pallas.1} parent=31 // pred_fallthru
        _
    $region32: #{mean_pallas.1} parent=5 // pred_fallthru
      _
  $region6: #{mean_pallas.1} parent=0 // loop_footer
    %s11 = sadd.s32 1, %s7
  $region7: #{mean_pallas.1} parent=0 // loop_footer_branch
    %6 = sbr.rel target = $region3
  $region8: #{mean_pallas.1} parent=0 // loop_exit
    _

</llo_original>
